<compile_context>
chip_gen: v5e
topology: v5e:2x2
jax: 0.10.0
libtpu: 0.0.40
codegen_flags: <defaults>
</compile_context>

<pallas_src>
import functools

import jax
import jax.numpy as jnp
import numpy as np
from jax.experimental import pallas as pl
from jax.experimental.pallas import tpu as pltpu

# The nine (ky, kx) taps of the 3x3 kernel, in the order the packed weight tensor is
# built.  Shared by the wrapper and the kernel body.
_TAPS = tuple((ky, kx) for ky in range(3) for kx in range(3))


def densfuse_kernel(ph_ref, cur_ref, up_ref, wb_ref, mask_ref, out_ref, *, width):
    """One batch element per grid step.

    ph_ref  : (1, 4, C, W+1+H*W) bf16  space-to-depth phases of `shallow`, left-padded
              with W+1 zero lanes (phase p=2a+b holds shallow[..., a::2, b::2], flat).
    cur_ref : (1, C, H*W) f32
    up_ref  : (1, C, H*W) bf16  separable x2 bilinear upsample of `deep`
    wb_ref  : (10, C, C)  f32   wb[t] = (BN-folded conv tap t)^T  (co, ci);
                                wb[9][:, 0] = folded BN bias (no separate (C,1) block)
    mask_ref: (1, H*W)    f32   0.0 where x == 0, else 1.0 (kills the previous-row wrap
                                of the kx==0 taps)
    out_ref : (1, C, H*W) out_dtype
    """
    C = cur_ref.shape[1]
    HW = cur_ref.shape[2]
    W = width

    # f32 VPU math throughout (v5e has no bf16 VALU); cast the phase block once.
    ph = ph_ref[0].astype(jnp.float32)            # (4, C, W+1+HW)
    mask = mask_ref[...]                          # (1, HW)

    # Start the accumulator at the folded BN bias (lane broadcast of wb[9][:, 0]).
    acc = jnp.broadcast_to(wb_ref[9][:, 0:1], (C, HW))

    # Stride-2 3x3 conv: every tap is a *contiguous* static lane-slice of one phase
    # image (offset in {0, 1, W, W+1}); kx==0 taps additionally mask the x==0 column.
    # Nine K=C MXU matmuls with f32 accumulation: the MXU shape (M=C=4) is poor, but the
    # kernel is HBM/overhead bound at this size; if C grows, switch to one concatenated
    # (C, 9C) x (9C, HW) matmul and pad C toward the MXU tile.
    for t, (ky, kx) in enumerate(_TAPS):
        p = 2 * ((ky + 1) % 2) + ((kx + 1) % 2)   # source-pixel parity phase = 2a + b
        off = (W + 1) - ((W if ky == 0 else 0) + (1 if kx == 0 else 0))
        tap = ph[p, :, off:off + HW]              # (C, HW) shifted tap
        if kx == 0:
            tap = tap * mask
        acc = acc + jnp.dot(wb_ref[t], tap, preferred_element_type=jnp.float32)

    conv = jnp.maximum(acc, 0.0)                  # folded-BN bias already in acc; ReLU
    out = conv + cur_ref[0] + up_ref[0].astype(jnp.float32)
    out_ref[0] = out.astype(out_ref.dtype)        # cast only at the (lane-dense) store


def bilinear_matrix(n_in, n_out):
    """Interpolation matrix matching F.interpolate(mode='bilinear', align_corners=False)."""
    out_idx = jnp.arange(n_out, dtype=jnp.float32)
    src = (out_idx + 0.5) * (n_in / n_out) - 0.5
    src = jnp.clip(src, 0.0, None)                # PyTorch clamps negative coords to 0
    i0 = jnp.minimum(jnp.floor(src).astype(jnp.int32), n_in - 1)
    i1 = jnp.minimum(i0 + 1, n_in - 1)
    w1 = src - i0.astype(jnp.float32)
    w0 = 1.0 - w1
    M = jnp.zeros((n_out, n_in), jnp.float32)
    M = M.at[jnp.arange(n_out), i0].add(w0)
    M = M.at[jnp.arange(n_out), i1].add(w1)
    return M


@functools.partial(jax.jit, static_argnames=("out_dtype",))
def densfuse(shallow, current, deep, w_folded, bias, mh, mw, out_dtype=jnp.float32):
    """shallow: (N, C, 2H, 2W); current: (N, C, H, W); deep: (N, C, H/2, W/2). NCHW f32."""
    N, C, H, W = current.shape
    HW = H * W
    L = W + 1 + HW

    # --- shallow: space-to-depth phase split (1.0x shallow bytes, vs. the 2.25x
    # materialised im2col tensor of the previous version).  Phase p = 2a+b holds
    # shallow[..., a::2, b::2]; the W+1 zero lanes of left padding turn all nine
    # stride-2 3x3 taps into static contiguous lane slices inside the kernel.
    phases = jnp.stack([shallow[:, :, a::2, b::2] for a in (0, 1) for b in (0, 1)],
                       axis=1)                                   # (N, 4, C, H, W)
    phases = phases.reshape(N, 4, C, HW)
    phases = jnp.pad(phases, ((0, 0), (0, 0), (0, 0), (W + 1, 0)))
    phases = phases.astype(jnp.bfloat16)                         # (N, 4, C, L)

    cur_flat = current.reshape(N, C, HW)                         # f32, read once

    # --- x2 bilinear upsample (align_corners=False), exact separable form:
    # O(h*H + w*W) operator storage instead of the dense (h*w, H*W) operator.
    # TODO(synk): at large H,W move these two small matmuls into the kernel with a
    # spatially-tiled (C, Ht, Wt) epilogue to also remove this HW-sized HBM round trip.
    up = jnp.einsum('yi,nciw->ncyw', mh, deep)                   # height: (N, C, H, w)
    up = jnp.einsum('xj,ncyj->ncyx', mw, up)                     # width : (N, C, H, W)
    up_flat = up.reshape(N, C, HW).astype(jnp.bfloat16)

    # --- BN-folded weights packed per tap; bias folded in as the 10th slice.
    wb = jnp.zeros((10, C, C), jnp.float32)
    for t, (ky, kx) in enumerate(_TAPS):
        wb = wb.at[t].set(w_folded[ky, kx].T)                    # (co, ci)
    wb = wb.at[9, :, 0].set(bias)

    # 0.0 at x == 0 lanes: kills the previous-row wrap of the kx==0 taps.
    mask_x0 = (jnp.arange(HW, dtype=jnp.int32) % W != 0).astype(jnp.float32).reshape(1, HW)

    # Per-step VMEM (double-buffered streams + invariants) is well under 1 MiB, so one
    # budget fits v5e/v6e (128 MiB) and v7x (64 MiB) alike.  At scale: re-derive the
    # spatial tile per generation, mark wb/mask pl.Buffered(1), and consider fp8 (v7x) /
    # int8 (v6e) for the phase stream if the conv ever becomes MXU-bound.
    kernel = functools.partial(densfuse_kernel, width=W)
    out_flat = pl.pallas_call(
        kernel,
        out_shape=jax.ShapeDtypeStruct((N, C, HW), out_dtype),
        grid=(N,),
        in_specs=[
            pl.BlockSpec((1, 4, C, L), lambda n: (n, 0, 0, 0)),
            pl.BlockSpec((1, C, HW), lambda n: (n, 0, 0)),
            pl.BlockSpec((1, C, HW), lambda n: (n, 0, 0)),
            pl.BlockSpec((10, C, C), lambda n: (0, 0, 0)),
            pl.BlockSpec((1, HW), lambda n: (0, 0)),
        ],
        out_specs=pl.BlockSpec((1, C, HW), lambda n: (n, 0, 0)),
        compiler_params=pltpu.CompilerParams(
            # Batch axis stays on the grid and "parallel": HW=256 lanes per step already
            # fill the MXU N dimension, per-step overhead is ~0.35us * N (negligible at
            # N=2), and keeping the batch axis lets v7x shard it across its 2 TensorCores
            # (the review's own caveat to item 3).
            dimension_semantics=("parallel",),
            vmem_limit_bytes=32 * 1024 * 1024,
        ),
    )(phases, cur_flat, up_flat, wb, mask_x0)

    return out_flat.reshape(N, C, H, W)


def densfuse_ref(shallow, current, deep, w_folded, bias, mh, mw):
    conv = jax.lax.conv_general_dilated(
        shallow, w_folded, window_strides=(2, 2), padding=((1, 1), (1, 1)),
        dimension_numbers=('NCHW', 'HWIO', 'NCHW'))
    conv = jnp.maximum(conv + bias[None, :, None, None], 0.0)
    up = jnp.einsum('yi,xj,ncij->ncyx', mh, mw, deep)
    return conv + current + up


if __name__ == "__main__":
    key = jax.random.PRNGKey(0)
    N, C = 2, 4
    H = W = 16
    h, w = H // 2, W // 2

    ks = jax.random.split(key, 8)
    shallow = jax.random.normal(ks[0], (N, C, 2 * H, 2 * W), jnp.float32)
    current = jax.random.normal(ks[1], (N, C, H, W), jnp.float32)
    deep = jax.random.normal(ks[2], (N, C, h, w), jnp.float32)

    # Deterministic synthetic parameters (conv HWIO weight + BN stats), BN folded.
    wgt = jax.random.normal(ks[3], (3, 3, C, C), jnp.float32) * 0.1
    gamma = jax.random.uniform(ks[4], (C,), jnp.float32, minval=0.5, maxval=1.5)
    beta = jax.random.normal(ks[5], (C,), jnp.float32) * 0.1
    run_mean = jax.random.normal(ks[6], (C,), jnp.float32) * 0.1
    run_var = jax.random.uniform(ks[7], (C,), jnp.float32, minval=0.5, maxval=1.5)
    eps = 1e-5
    scale = gamma / jnp.sqrt(run_var + eps)
    w_folded = wgt * scale[None, None, None, :]
    bias = beta - run_mean * scale

    # Exact x2 bilinear (align_corners=False) interpolation operators (separable form).
    mh = bilinear_matrix(h, H)     # (H, h)
    mw = bilinear_matrix(w, W)     # (W, w)

    out = densfuse(shallow, current, deep, w_folded, bias, mh, mw)
    out = jax.block_until_ready(out)

    ref = densfuse_ref(shallow, current, deep, w_folded, bias, mh, mw)
    # bf16 phase/upsample streams (f32 accumulation) -> looser tolerance than pure f32.
    np.testing.assert_allclose(np.asarray(out), np.asarray(ref), atol=5e-2, rtol=5e-2)
    print("KERNEL_OK")
</pallas_src>

<mosaic_0001>
module attributes {stable_mosaic.version = 11 : i64} {
  func.func @densfuse_kernel(%arg0: i32, %arg1: memref<1x4x4x273xbf16, #tpu.memory_space<vmem>>, %arg2: memref<1x4x256xf32, #tpu.memory_space<vmem>>, %arg3: memref<1x4x256xbf16, #tpu.memory_space<vmem>>, %arg4: memref<10x4x4xf32, #tpu.memory_space<vmem>>, %arg5: memref<1x256xf32, #tpu.memory_space<vmem>>, %arg6: memref<1x4x256xf32, #tpu.memory_space<vmem>>) attributes {dimension_semantics = [#tpu.dimension_semantics<parallel>], iteration_bounds = array<i64: 2>, scalar_prefetch = 0 : i64, scratch_operands = 0 : i64, tpu.core_type = #tpu.core_type<tc>, window_params = [{transform_indices = @transform_0, window_bounds = array<i64: 1, 4, 4, 273>}, {transform_indices = @transform_1, window_bounds = array<i64: 1, 4, 256>}, {transform_indices = @transform_2, window_bounds = array<i64: 1, 4, 256>}, {pipeline_mode = #tpu.pipeline_mode<synchronous>, transform_indices = @transform_3, window_bounds = array<i64: 10, 4, 4>}, {pipeline_mode = #tpu.pipeline_mode<synchronous>, transform_indices = @transform_4, window_bounds = array<i64: 1, 256>}, {transform_indices = @transform_5, window_bounds = array<i64: 1, 4, 256>}]} {
    %c0 = arith.constant 0 : index
    %c0_0 = arith.constant 0 : index
    %c0_1 = arith.constant 0 : index
    %c0_2 = arith.constant 0 : index
    %0 = vector.load %arg1[%c0, %c0_0, %c0_1, %c0_2] : memref<1x4x4x273xbf16, #tpu.memory_space<vmem>>, vector<1x4x4x273xbf16>
    %1 = vector.shape_cast %0 : vector<1x4x4x273xbf16> to vector<4x4x273xbf16>
    %2 = arith.extf %1 : vector<4x4x273xbf16> to vector<4x4x273xf32>
    %c0_3 = arith.constant 0 : index
    %c0_4 = arith.constant 0 : index
    %3 = vector.load %arg5[%c0_3, %c0_4] : memref<1x256xf32, #tpu.memory_space<vmem>>, vector<1x256xf32>
    %c9 = arith.constant 9 : index
    %c0_5 = arith.constant 0 : index
    %c0_6 = arith.constant 0 : index
    %4 = vector.load %arg4[%c9, %c0_5, %c0_6] : memref<10x4x4xf32, #tpu.memory_space<vmem>>, vector<1x4x4xf32>
    %5 = vector.shape_cast %4 : vector<1x4x4xf32> to vector<4x4xf32>
    %6 = vector.extract_strided_slice %5 {offsets = [0, 0], sizes = [4, 1], strides = [1, 1]} : vector<4x4xf32> to vector<4x1xf32>
    %7 = vector.shape_cast %6 : vector<4x1xf32> to vector<4x1xf32>
    %8 = vector.broadcast %7 : vector<4x1xf32> to vector<4x256xf32>
    %9 = vector.extract_strided_slice %2 {offsets = [3, 0, 0], sizes = [1, 4, 256], strides = [1, 1, 1]} : vector<4x4x273xf32> to vector<1x4x256xf32>
    %10 = vector.shape_cast %9 : vector<1x4x256xf32> to vector<4x256xf32>
    %11 = vector.broadcast %3 : vector<1x256xf32> to vector<4x256xf32>
    %12 = arith.mulf %10, %11 : vector<4x256xf32>
    %c0_7 = arith.constant 0 : index
    %c0_8 = arith.constant 0 : index
    %c0_9 = arith.constant 0 : index
    %13 = vector.load %arg4[%c0_7, %c0_8, %c0_9] : memref<10x4x4xf32, #tpu.memory_space<vmem>>, vector<1x4x4xf32>
    %14 = vector.shape_cast %13 : vector<1x4x4xf32> to vector<4x4xf32>
    %cst = arith.constant dense<0.000000e+00> : vector<4x256xf32>
    %15 = tpu.matmul %14, %12, %cst {dimension_numbers = #tpu.dot_dimension_numbers<[1], [0], [0], [1], [0, 0, 1, 1], [], []>} : vector<4x4xf32>, vector<4x256xf32>, vector<4x256xf32> -> vector<4x256xf32>
    %16 = arith.addf %8, %15 : vector<4x256xf32>
    %17 = vector.extract_strided_slice %2 {offsets = [2, 0, 1], sizes = [1, 4, 256], strides = [1, 1, 1]} : vector<4x4x273xf32> to vector<1x4x256xf32>
    %18 = vector.shape_cast %17 : vector<1x4x256xf32> to vector<4x256xf32>
    %c1 = arith.constant 1 : index
    %c0_10 = arith.constant 0 : index
    %c0_11 = arith.constant 0 : index
    %19 = vector.load %arg4[%c1, %c0_10, %c0_11] : memref<10x4x4xf32, #tpu.memory_space<vmem>>, vector<1x4x4xf32>
    %20 = vector.shape_cast %19 : vector<1x4x4xf32> to vector<4x4xf32>
    %cst_12 = arith.constant dense<0.000000e+00> : vector<4x256xf32>
    %21 = tpu.matmul %20, %18, %cst_12 {dimension_numbers = #tpu.dot_dimension_numbers<[1], [0], [0], [1], [0, 0, 1, 1], [], []>} : vector<4x4xf32>, vector<4x256xf32>, vector<4x256xf32> -> vector<4x256xf32>
    %22 = arith.addf %16, %21 : vector<4x256xf32>
    %23 = vector.extract_strided_slice %2 {offsets = [3, 0, 1], sizes = [1, 4, 256], strides = [1, 1, 1]} : vector<4x4x273xf32> to vector<1x4x256xf32>
    %24 = vector.shape_cast %23 : vector<1x4x256xf32> to vector<4x256xf32>
    %c2 = arith.constant 2 : index
    %c0_13 = arith.constant 0 : index
    %c0_14 = arith.constant 0 : index
    %25 = vector.load %arg4[%c2, %c0_13, %c0_14] : memref<10x4x4xf32, #tpu.memory_space<vmem>>, vector<1x4x4xf32>
    %26 = vector.shape_cast %25 : vector<1x4x4xf32> to vector<4x4xf32>
    %cst_15 = arith.constant dense<0.000000e+00> : vector<4x256xf32>
    %27 = tpu.matmul %26, %24, %cst_15 {dimension_numbers = #tpu.dot_dimension_numbers<[1], [0], [0], [1], [0, 0, 1, 1], [], []>} : vector<4x4xf32>, vector<4x256xf32>, vector<4x256xf32> -> vector<4x256xf32>
    %28 = arith.addf %22, %27 : vector<4x256xf32>
    %29 = vector.extract_strided_slice %2 {offsets = [1, 0, 16], sizes = [1, 4, 256], strides = [1, 1, 1]} : vector<4x4x273xf32> to vector<1x4x256xf32>
    %30 = vector.shape_cast %29 : vector<1x4x256xf32> to vector<4x256xf32>
    %31 = vector.broadcast %3 : vector<1x256xf32> to vector<4x256xf32>
    %32 = arith.mulf %30, %31 : vector<4x256xf32>
    %c3 = arith.constant 3 : index
    %c0_16 = arith.constant 0 : index
    %c0_17 = arith.constant 0 : index
    %33 = vector.load %arg4[%c3, %c0_16, %c0_17] : memref<10x4x4xf32, #tpu.memory_space<vmem>>, vector<1x4x4xf32>
    %34 = vector.shape_cast %33 : vector<1x4x4xf32> to vector<4x4xf32>
    %cst_18 = arith.constant dense<0.000000e+00> : vector<4x256xf32>
    %35 = tpu.matmul %34, %32, %cst_18 {dimension_numbers = #tpu.dot_dimension_numbers<[1], [0], [0], [1], [0, 0, 1, 1], [], []>} : vector<4x4xf32>, vector<4x256xf32>, vector<4x256xf32> -> vector<4x256xf32>
    %36 = arith.addf %28, %35 : vector<4x256xf32>
    %37 = vector.extract_strided_slice %2 {offsets = [0, 0, 17], sizes = [1, 4, 256], strides = [1, 1, 1]} : vector<4x4x273xf32> to vector<1x4x256xf32>
    %38 = vector.shape_cast %37 : vector<1x4x256xf32> to vector<4x256xf32>
    %c4 = arith.constant 4 : index
    %c0_19 = arith.constant 0 : index
    %c0_20 = arith.constant 0 : index
    %39 = vector.load %arg4[%c4, %c0_19, %c0_20] : memref<10x4x4xf32, #tpu.memory_space<vmem>>, vector<1x4x4xf32>
    %40 = vector.shape_cast %39 : vector<1x4x4xf32> to vector<4x4xf32>
    %cst_21 = arith.constant dense<0.000000e+00> : vector<4x256xf32>
    %41 = tpu.matmul %40, %38, %cst_21 {dimension_numbers = #tpu.dot_dimension_numbers<[1], [0], [0], [1], [0, 0, 1, 1], [], []>} : vector<4x4xf32>, vector<4x256xf32>, vector<4x256xf32> -> vector<4x256xf32>
    %42 = arith.addf %36, %41 : vector<4x256xf32>
    %43 = vector.extract_strided_slice %2 {offsets = [1, 0, 17], sizes = [1, 4, 256], strides = [1, 1, 1]} : vector<4x4x273xf32> to vector<1x4x256xf32>
    %44 = vector.shape_cast %43 : vector<1x4x256xf32> to vector<4x256xf32>
    %c5 = arith.constant 5 : index
    %c0_22 = arith.constant 0 : index
    %c0_23 = arith.constant 0 : index
    %45 = vector.load %arg4[%c5, %c0_22, %c0_23] : memref<10x4x4xf32, #tpu.memory_space<vmem>>, vector<1x4x4xf32>
    %46 = vector.shape_cast %45 : vector<1x4x4xf32> to vector<4x4xf32>
    %cst_24 = arith.constant dense<0.000000e+00> : vector<4x256xf32>
    %47 = tpu.matmul %46, %44, %cst_24 {dimension_numbers = #tpu.dot_dimension_numbers<[1], [0], [0], [1], [0, 0, 1, 1], [], []>} : vector<4x4xf32>, vector<4x256xf32>, vector<4x256xf32> -> vector<4x256xf32>
    %48 = arith.addf %42, %47 : vector<4x256xf32>
    %49 = vector.extract_strided_slice %2 {offsets = [3, 0, 16], sizes = [1, 4, 256], strides = [1, 1, 1]} : vector<4x4x273xf32> to vector<1x4x256xf32>
    %50 = vector.shape_cast %49 : vector<1x4x256xf32> to vector<4x256xf32>
    %51 = vector.broadcast %3 : vector<1x256xf32> to vector<4x256xf32>
    %52 = arith.mulf %50, %51 : vector<4x256xf32>
    %c6 = arith.constant 6 : index
    %c0_25 = arith.constant 0 : index
    %c0_26 = arith.constant 0 : index
    %53 = vector.load %arg4[%c6, %c0_25, %c0_26] : memref<10x4x4xf32, #tpu.memory_space<vmem>>, vector<1x4x4xf32>
    %54 = vector.shape_cast %53 : vector<1x4x4xf32> to vector<4x4xf32>
    %cst_27 = arith.constant dense<0.000000e+00> : vector<4x256xf32>
    %55 = tpu.matmul %54, %52, %cst_27 {dimension_numbers = #tpu.dot_dimension_numbers<[1], [0], [0], [1], [0, 0, 1, 1], [], []>} : vector<4x4xf32>, vector<4x256xf32>, vector<4x256xf32> -> vector<4x256xf32>
    %56 = arith.addf %48, %55 : vector<4x256xf32>
    %57 = vector.extract_strided_slice %2 {offsets = [2, 0, 17], sizes = [1, 4, 256], strides = [1, 1, 1]} : vector<4x4x273xf32> to vector<1x4x256xf32>
    %58 = vector.shape_cast %57 : vector<1x4x256xf32> to vector<4x256xf32>
    %c7 = arith.constant 7 : index
    %c0_28 = arith.constant 0 : index
    %c0_29 = arith.constant 0 : index
    %59 = vector.load %arg4[%c7, %c0_28, %c0_29] : memref<10x4x4xf32, #tpu.memory_space<vmem>>, vector<1x4x4xf32>
    %60 = vector.shape_cast %59 : vector<1x4x4xf32> to vector<4x4xf32>
    %cst_30 = arith.constant dense<0.000000e+00> : vector<4x256xf32>
    %61 = tpu.matmul %60, %58, %cst_30 {dimension_numbers = #tpu.dot_dimension_numbers<[1], [0], [0], [1], [0, 0, 1, 1], [], []>} : vector<4x4xf32>, vector<4x256xf32>, vector<4x256xf32> -> vector<4x256xf32>
    %62 = arith.addf %56, %61 : vector<4x256xf32>
    %63 = vector.extract_strided_slice %2 {offsets = [3, 0, 17], sizes = [1, 4, 256], strides = [1, 1, 1]} : vector<4x4x273xf32> to vector<1x4x256xf32>
    %64 = vector.shape_cast %63 : vector<1x4x256xf32> to vector<4x256xf32>
    %c8 = arith.constant 8 : index
    %c0_31 = arith.constant 0 : index
    %c0_32 = arith.constant 0 : index
    %65 = vector.load %arg4[%c8, %c0_31, %c0_32] : memref<10x4x4xf32, #tpu.memory_space<vmem>>, vector<1x4x4xf32>
    %66 = vector.shape_cast %65 : vector<1x4x4xf32> to vector<4x4xf32>
    %cst_33 = arith.constant dense<0.000000e+00> : vector<4x256xf32>
    %67 = tpu.matmul %66, %64, %cst_33 {dimension_numbers = #tpu.dot_dimension_numbers<[1], [0], [0], [1], [0, 0, 1, 1], [], []>} : vector<4x4xf32>, vector<4x256xf32>, vector<4x256xf32> -> vector<4x256xf32>
    %68 = arith.addf %62, %67 : vector<4x256xf32>
    %cst_34 = arith.constant 0.000000e+00 : f32
    %69 = vector.broadcast %cst_34 : f32 to vector<4x256xf32>
    %70 = arith.maximumf %68, %69 : vector<4x256xf32>
    %c0_35 = arith.constant 0 : index
    %c0_36 = arith.constant 0 : index
    %c0_37 = arith.constant 0 : index
    %71 = vector.load %arg2[%c0_35, %c0_36, %c0_37] : memref<1x4x256xf32, #tpu.memory_space<vmem>>, vector<1x4x256xf32>
    %72 = vector.shape_cast %71 : vector<1x4x256xf32> to vector<4x256xf32>
    %73 = arith.addf %70, %72 : vector<4x256xf32>
    %c0_38 = arith.constant 0 : index
    %c0_39 = arith.constant 0 : index
    %c0_40 = arith.constant 0 : index
    %74 = vector.load %arg3[%c0_38, %c0_39, %c0_40] : memref<1x4x256xbf16, #tpu.memory_space<vmem>>, vector<1x4x256xbf16>
    %75 = vector.shape_cast %74 : vector<1x4x256xbf16> to vector<4x256xbf16>
    %76 = arith.extf %75 : vector<4x256xbf16> to vector<4x256xf32>
    %77 = arith.addf %73, %76 : vector<4x256xf32>
    %c0_41 = arith.constant 0 : index
    %c0_42 = arith.constant 0 : index
    %c0_43 = arith.constant 0 : index
    %78 = vector.load %arg6[%c0_41, %c0_42, %c0_43] : memref<1x4x256xf32, #tpu.memory_space<vmem>>, vector<1x4x256xf32>
    %79 = vector.shape_cast %78 : vector<1x4x256xf32> to vector<4x256xf32>
    %80 = vector.shape_cast %77 : vector<4x256xf32> to vector<1x4x256xf32>
    tpu.vector_store %arg6[%c0_41, %c0_42, %c0_43], %80 {strides = array<i32>} : memref<1x4x256xf32, #tpu.memory_space<vmem>>, vector<1x4x256xf32>,
    return
  }
  func.func @transform_0(%arg0: i32) -> (i32, i32, i32, i32) {
    %c0_i32 = arith.constant 0 : i32
    %c0_i32_0 = arith.constant 0 : i32
    %c0_i32_1 = arith.constant 0 : i32
    %c0_i32_2 = arith.constant 0 : i32
    return %arg0, %c0_i32, %c0_i32_0, %c0_i32_1 : i32, i32, i32, i32
  }
  func.func @transform_1(%arg0: i32) -> (i32, i32, i32) {
    %c0_i32 = arith.constant 0 : i32
    %c0_i32_0 = arith.constant 0 : i32
    %c0_i32_1 = arith.constant 0 : i32
    return %arg0, %c0_i32, %c0_i32_0 : i32, i32, i32
  }
  func.func @transform_2(%arg0: i32) -> (i32, i32, i32) {
    %c0_i32 = arith.constant 0 : i32
    %c0_i32_0 = arith.constant 0 : i32
    %c0_i32_1 = arith.constant 0 : i32
    return %arg0, %c0_i32, %c0_i32_0 : i32, i32, i32
  }
  func.func @transform_3(%arg0: i32) -> (i32, i32, i32) {
    %c0_i32 = arith.constant 0 : i32
    %c0_i32_0 = arith.constant 0 : i32
    %c0_i32_1 = arith.constant 0 : i32
    %c0_i32_2 = arith.constant 0 : i32
    return %c0_i32, %c0_i32_0, %c0_i32_1 : i32, i32, i32
  }
  func.func @transform_4(%arg0: i32) -> (i32, i32) {
    %c0_i32 = arith.constant 0 : i32
    %c0_i32_0 = arith.constant 0 : i32
    %c0_i32_1 = arith.constant 0 : i32
    return %c0_i32, %c0_i32_0 : i32, i32
  }
  func.func @transform_5(%arg0: i32) -> (i32, i32, i32) {
    %c0_i32 = arith.constant 0 : i32
    %c0_i32_0 = arith.constant 0 : i32
    %c0_i32_1 = arith.constant 0 : i32
    return %arg0, %c0_i32, %c0_i32_0 : i32, i32, i32
  }
}

</mosaic_0001>

<llo_original>
// kernel: densfuse.1
$region0: #{densfuse.1}
  #allocation0 [shape = 'u32[]', space=smem, size = 0x4, offset = 0x4, fixed_abs, tag = 'smem constant byte address 0x4 - core index']
  #allocation1 [shape = 'u32[72,128]{1,0:T(1,128)}', space=vmem, size = 0x9000, scoped, tag = 'internal scratch']
  %s0 = inlined_call_operand.vmem [shape: bf16[2,4,4,273], index: 0, kind: input, shape index: {}]
  %s1 = inlined_call_operand.vmem [shape: f32[2,4,256], index: 1, kind: input, shape index: {}]
  %s2 = inlined_call_operand.vmem [shape: bf16[2,4,256], index: 2, kind: input, shape index: {}]
  %s3 = inlined_call_operand.vmem [shape: f32[10,4,4], index: 3, kind: input, shape index: {}]
  %s4 = inlined_call_operand.vmem [shape: f32[1,256], index: 4, kind: input, shape index: {}]
  %s5 = inlined_call_operand.vmem [shape: f32[2,4,256], index: 5, kind: output, shape index: {}]
  %s6 = sld [smem:[#allocation0]]
  $region53: #{densfuse.1} parent=0
    _
  %s8 = ssub.s32 1, %s6
  %s9 = scalar_select 0, %s8, %s6
  loop: start=0, step=1, limit=4
  $region2: #{densfuse.1} parent=0 // loop_pre_header
    _
  $region3: #{densfuse.1} parent=0 // loop_header
    %s11 = sphi 0, %s15
    %p12 = scmp.ge.s32.totalorder %s11, 4
    %s21 = sphi 0, %s23
    %s24 = sphi 0, %s21
    %s25 = sphi 0, %s24
    %s41 = sphi 0, %s25
    %s47 = sphi 0, %s49
    %s50 = sphi 0, %s47
    %s51 = sphi 0, %s50
    %s67 = sphi 0, %s51
    %s73 = sphi 0, %s75
    %s76 = sphi 0, %s73
    %s77 = sphi 0, %s76
    %s93 = sphi 0, %s77
    %s97 = sphi 0, %s97
    %s99 = sphi 0, %s97
    %s100 = sphi 0, %s99
    %s114 = sphi 0, %s100
    %s118 = sphi 0, %s118
    %s120 = sphi 0, %s118
    %s121 = sphi 0, %s120
    %s135 = sphi 0, %s121
    %s141 = sphi 0, %s143
    %s144 = sphi 0, %s141
    %s145 = sphi 0, %s144
    %s161 = sphi 0, %s145
  $region4: #{densfuse.1} parent=0 // loop_header_branch
    %14 = sbr.rel (%p12) target = $region8
  $region5: #{densfuse.1} parent=0 // loop_body
    %s16 = ssub.s32 %s11, 1
    %s17 = ssub.s32 %s11, 2
    %s18 = sadd.s32 %s11, 1
    %s19 = ssub.s32 %s11, %s18
    %p20 = scmp.eq.s32.totalorder %s19, 0
    %s22 = sadd.s32 %s21, 1
    %s23 = scalar_select %p20, %s21, %s22
    %p26 = pneg %p20
    %p27 = scmp.eq.s32.totalorder %s11, 1
    %p28 = por %p26, %p27
    %p29 = scmp.ne.s32.totalorder %s21, %s24
    %p30 = scmp.eq.s32.totalorder %s11, 0
    %p31 = por %p29, %p30
    %p32 = scmp.ne.s32.totalorder %s21, %s24
    %p33 = scmp.eq.s32.totalorder %s16, 1
    %p34 = por %p32, %p33
    %p35 = scmp.ne.s32.totalorder %s24, %s25
    %p36 = scmp.eq.s32.totalorder %s16, 0
    %p37 = por %p35, %p36
    %p38 = scmp.ne.s32.totalorder %s24, %s25
    %p39 = scmp.eq.s32.totalorder %s17, 1
    %p40 = por %p38, %p39
    %p42 = scmp.ne.s32.totalorder %s25, %s41
    %p43 = scmp.eq.s32.totalorder %s17, 0
    %p44 = por %p42, %p43
    %s45 = ssub.s32 %s11, %s18
    %p46 = scmp.eq.s32.totalorder %s45, 0
    %s48 = sadd.s32 %s47, 1
    %s49 = scalar_select %p46, %s47, %s48
    %p52 = pneg %p46
    %p53 = scmp.eq.s32.totalorder %s11, 1
    %p54 = por %p52, %p53
    %p55 = scmp.ne.s32.totalorder %s47, %s50
    %p56 = scmp.eq.s32.totalorder %s11, 0
    %p57 = por %p55, %p56
    %p58 = scmp.ne.s32.totalorder %s47, %s50
    %p59 = scmp.eq.s32.totalorder %s16, 1
    %p60 = por %p58, %p59
    %p61 = scmp.ne.s32.totalorder %s50, %s51
    %p62 = scmp.eq.s32.totalorder %s16, 0
    %p63 = por %p61, %p62
    %p64 = scmp.ne.s32.totalorder %s50, %s51
    %p65 = scmp.eq.s32.totalorder %s17, 1
    %p66 = por %p64, %p65
    %p68 = scmp.ne.s32.totalorder %s51, %s67
    %p69 = scmp.eq.s32.totalorder %s17, 0
    %p70 = por %p68, %p69
    %s71 = ssub.s32 %s11, %s18
    %p72 = scmp.eq.s32.totalorder %s71, 0
    %s74 = sadd.s32 %s73, 1
    %s75 = scalar_select %p72, %s73, %s74
    %p78 = pneg %p72
    %p79 = scmp.eq.s32.totalorder %s11, 1
    %p80 = por %p78, %p79
    %p81 = scmp.ne.s32.totalorder %s73, %s76
    %p82 = scmp.eq.s32.totalorder %s11, 0
    %p83 = por %p81, %p82
    %p84 = scmp.ne.s32.totalorder %s73, %s76
    %p85 = scmp.eq.s32.totalorder %s16, 1
    %p86 = por %p84, %p85
    %p87 = scmp.ne.s32.totalorder %s76, %s77
    %p88 = scmp.eq.s32.totalorder %s16, 0
    %p89 = por %p87, %p88
    %p90 = scmp.ne.s32.totalorder %s76, %s77
    %p91 = scmp.eq.s32.totalorder %s17, 1
    %p92 = por %p90, %p91
    %p94 = scmp.ne.s32.totalorder %s77, %s93
    %p95 = scmp.eq.s32.totalorder %s17, 0
    %p96 = por %p94, %p95
    %s98 = sadd.s32 %s97, 1
    %p101 = scmp.eq.s32.totalorder %s11, 1
    %p102 = scmp.ne.s32.totalorder %s97, %s99
    %p103 = scmp.eq.s32.totalorder %s11, 0
    %p104 = por %p102, %p103
    %p105 = scmp.ne.s32.totalorder %s97, %s99
    %p106 = scmp.eq.s32.totalorder %s16, 1
    %p107 = por %p105, %p106
    %p108 = scmp.ne.s32.totalorder %s99, %s100
    %p109 = scmp.eq.s32.totalorder %s16, 0
    %p110 = por %p108, %p109
    %p111 = scmp.ne.s32.totalorder %s99, %s100
    %p112 = scmp.eq.s32.totalorder %s17, 1
    %p113 = por %p111, %p112
    %p115 = scmp.ne.s32.totalorder %s100, %s114
    %p116 = scmp.eq.s32.totalorder %s17, 0
    %p117 = por %p115, %p116
    %s119 = sadd.s32 %s118, 1
    %p122 = scmp.eq.s32.totalorder %s11, 1
    %p123 = scmp.ne.s32.totalorder %s118, %s120
    %p124 = scmp.eq.s32.totalorder %s11, 0
    %p125 = por %p123, %p124
    %p126 = scmp.ne.s32.totalorder %s118, %s120
    %p127 = scmp.eq.s32.totalorder %s16, 1
    %p128 = por %p126, %p127
    %p129 = scmp.ne.s32.totalorder %s120, %s121
    %p130 = scmp.eq.s32.totalorder %s16, 0
    %p131 = por %p129, %p130
    %p132 = scmp.ne.s32.totalorder %s120, %s121
    %p133 = scmp.eq.s32.totalorder %s17, 1
    %p134 = por %p132, %p133
    %p136 = scmp.ne.s32.totalorder %s121, %s135
    %p137 = scmp.eq.s32.totalorder %s17, 0
    %p138 = por %p136, %p137
    %s139 = ssub.s32 %s11, %s18
    %p140 = scmp.eq.s32.totalorder %s139, 0
    %s142 = sadd.s32 %s141, 1
    %s143 = scalar_select %p140, %s141, %s142
    %p146 = pneg %p140
    %p147 = scmp.eq.s32.totalorder %s11, 1
    %p148 = por %p146, %p147
    %p149 = scmp.ne.s32.totalorder %s141, %s144
    %p150 = scmp.eq.s32.totalorder %s11, 0
    %p151 = por %p149, %p150
    %p152 = scmp.ne.s32.totalorder %s141, %s144
    %p153 = scmp.eq.s32.totalorder %s16, 1
    %p154 = por %p152, %p153
    %p155 = scmp.ne.s32.totalorder %s144, %s145
    %p156 = scmp.eq.s32.totalorder %s16, 0
    %p157 = por %p155, %p156
    %p158 = scmp.ne.s32.totalorder %s144, %s145
    %p159 = scmp.eq.s32.totalorder %s17, 1
    %p160 = por %p158, %p159
    %p162 = scmp.ne.s32.totalorder %s145, %s161
    %p163 = scmp.eq.s32.totalorder %s17, 0
    %p164 = por %p162, %p163
    %p165 = scmp.le.s32.totalorder 1, %s11
    %p166 = scmp.lt.s32.totalorder %s11, 3
    %p167 = pnand %p165, %p166
    %p168 = pneg %p167
    // Predicated region
    $region9: #{densfuse.1} parent=5 // pred_check
      _
    $region10: #{densfuse.1} parent=5 // pred_check_branch
      %170 = sbr.rel (%p167) target = $region12
    $region11: #{densfuse.1} parent=5 // pred_region
      %s171 = ssub.s32 %s11, 1
      // Predicated region
      $region13: #{densfuse.1} parent=11 // pred_check
        %p172 = pneg %p110
      $region14: #{densfuse.1} parent=11 // pred_check_branch
        %174 = sbr.rel (%p172) target = $region16
      $region15: #{densfuse.1} parent=11 // pred_region
        _
      $region16: #{densfuse.1} parent=11 // pred_fallthru
        _
      // Predicated region
      $region17: #{densfuse.1} parent=11 // pred_check
        %p175 = pneg %p131
      $region18: #{densfuse.1} parent=11 // pred_check_branch
        %177 = sbr.rel (%p175) target = $region20
      $region19: #{densfuse.1} parent=11 // pred_region
        _
      $region20: #{densfuse.1} parent=11 // pred_fallthru
        _
    $region12: #{densfuse.1} parent=5 // pred_fallthru
      _
    %p178 = scmp.lt.s32.totalorder %s11, 2
    // Predicated region
    $region21: #{densfuse.1} parent=5 // pred_check
      %p179 = pneg %p178
    $region22: #{densfuse.1} parent=5 // pred_check_branch
      %181 = sbr.rel (%p179) target = $region24
    $region23: #{densfuse.1} parent=5 // pred_region
      // Predicated region
      $region25: #{densfuse.1} parent=23 // pred_check
        %p182 = pneg %p31
      $region26: #{densfuse.1} parent=23 // pred_check_branch
        %184 = sbr.rel (%p182) target = $region28
      $region27: #{densfuse.1} parent=23 // pred_region
        %p185 = scmp.lt.s32.totalorder %s11, 1
        %s186 = scalar_select %p185, %s11, 1
        %s187 = smul.addr %s186, 12
        %s188 = smul.addr %s187, 2
        %s189 = scalar_lea.vmem %s0, %s188
      $region28: #{densfuse.1} parent=23 // pred_fallthru
        _
      // Predicated region
      $region29: #{densfuse.1} parent=23 // pred_check
        %p190 = pneg %p57
      $region30: #{densfuse.1} parent=23 // pred_check_branch
        %192 = sbr.rel (%p190) target = $region32
      $region31: #{densfuse.1} parent=23 // pred_region
        %p193 = scmp.lt.s32.totalorder %s11, 1
        %s194 = scalar_select %p193, %s11, 1
        %s195 = smul.addr %s194, 2
        %s196 = smul.addr %s195, 4
        %s197 = scalar_lea.vmem %s1, %s196
      $region32: #{densfuse.1} parent=23 // pred_fallthru
        _
      // Predicated region
      $region33: #{densfuse.1} parent=23 // pred_check
        %p198 = pneg %p83
      $region34: #{densfuse.1} parent=23 // pred_check_branch
        %200 = sbr.rel (%p198) target = $region36
      $region35: #{densfuse.1} parent=23 // pred_region
        %p201 = scmp.lt.s32.totalorder %s11, 1
        %s202 = scalar_select %p201, %s11, 1
        %s203 = smul.addr %s202, 2
        %s204 = smul.addr %s203, 2
        %s205 = scalar_lea.vmem %s2, %s204
      $region36: #{densfuse.1} parent=23 // pred_fallthru
        _
    $region24: #{densfuse.1} parent=5 // pred_fallthru
      _
    %p206 = scmp.le.s32.totalorder 1, %s11
    %p207 = scmp.lt.s32.totalorder %s11, 3
    %p208 = pnand %p206, %p207
    %p209 = pneg %p208
    // Predicated region
    $region37: #{densfuse.1} parent=5 // pred_check
      _
    $region38: #{densfuse.1} parent=5 // pred_check_branch
      %211 = sbr.rel (%p208) target = $region40
    $region39: #{densfuse.1} parent=5 // pred_region
      %s212 = ssub.s32 %s11, 1
      %p213 = scmp.lt.s32.totalorder %s16, 1
      %s214 = scalar_select %p213, %s16, 1
      %s215 = smul.addr %s214, 12
      %s216 = smul.addr %s215, 2
      %s217 = scalar_lea.vmem %s0, %s216
      %p218 = pneg %p37
      %p219 = pneg %p34
      %p220 = scmp.lt.s32.totalorder %s16, 1
      %s221 = scalar_select %p220, %s16, 1
      %s222 = smul.addr %s221, 2
      %s223 = smul.addr %s222, 4
      %s224 = scalar_lea.vmem %s1, %s223
      %p225 = pneg %p63
      %p226 = pneg %p60
      %p227 = scmp.lt.s32.totalorder %s16, 1
      %s228 = scalar_select %p227, %s16, 1
      %s229 = smul.addr %s228, 2
      %s230 = smul.addr %s229, 2
      %s231 = scalar_lea.vmem %s2, %s230
      %p232 = pneg %p89
      %p233 = pneg %p86
      %p234 = pneg %p110
      %p235 = pneg %p107
      %p236 = pneg %p131
      %p237 = pneg %p128
      %p238 = pneg %p157
      %p239 = pneg %p154
      %p240 = scmp.lt.s32.totalorder %s16, 1
      %s241 = scalar_select %p240, %s16, 1
      %s242 = smul.addr %s241, 2
      %s243 = smul.addr %s242, 4
      %s244 = scalar_lea.vmem %s5, %s243
      %p245 = scmp.lt.s32.totalorder %s16, 1
      %s246 = scalar_select %p245, %s16, 1
      %s247 = smul.addr %s246, 12
      %s248 = smul.addr %s247, 2
      %s249 = scalar_lea.vmem %s0, %s248
      %p250 = scmp.lt.s32.totalorder %s16, 1
      %s251 = scalar_select %p250, %s16, 1
      %s252 = smul.addr %s251, 2
      %s253 = smul.addr %s252, 4
      %s254 = scalar_lea.vmem %s1, %s253
      %p255 = scmp.lt.s32.totalorder %s16, 1
      %s256 = scalar_select %p255, %s16, 1
      %s257 = smul.addr %s256, 2
      %s258 = smul.addr %s257, 2
      %s259 = scalar_lea.vmem %s2, %s258
      %p260 = scmp.lt.s32.totalorder %s16, 1
      %s261 = scalar_select %p260, %s16, 1
      %s262 = smul.addr %s261, 2
      %s263 = smul.addr %s262, 4
      %s264 = scalar_lea.vmem %s5, %s263
      %v265 = vld [vmem:[%s249] sm:$0x3f]
      %v266 = vld [vmem:[%s249 + $0x6] sm:$0x3f]
      %v267 = vld [vmem:[%s249 + $0xc] sm:$0x3f]
      %v268 = vld [vmem:[%s249 + $0x12] sm:$0x3f]
      %v269 = vunpack.c.l.bf16 %v265
      %v270 = vunpack.c.h.bf16 %v265
      %v271 = vunpack.c.l.bf16 %v266
      %v272 = vunpack.c.h.bf16 %v266
      %v273 = vunpack.c.l.bf16 %v267
      %v274 = vunpack.c.h.bf16 %v267
      %v275 = vunpack.c.l.bf16 %v268
      %v276 = vunpack.c.h.bf16 %v268
      %v277 = vld [vmem:[%s4] sm:$0x3]
      %s278 = scalar_lea.vmem %s3, 36
      %v279 = vld [vmem:[%s278] sm:$0xf]
      %281 = vset.pattern.permute.xlu0 0
      %282 = vperm.xlu0 %281, %v279
      %v283 = vpop.permute.xlu0 %282
      %v286 = vperm.slane %v277, 0
      %v287 = vperm.slane %v277, 1
      %v288 = vrot.slane %v287, 4
      %vm289 = vcmask 1043456
      %v290 = vsel %vm289, %v286, %v288
      %v292 = vmul.f32 %v275, %v290
      %v293 = vld [vmem:[%s3] sm:$0xf]
      %295 = vst [vmem:[#allocation1] ss:$2 sm:$0xff] %v292
      %v296 = vld.sshfl [vmem:[#allocation1] sm:$0xff pattern:$0x75316420]
      %v297 = vld.sshfl [vmem:[#allocation1 + $0x8] sm:$0xff pattern:$0x75316420]
      %vm298 = vcmask 31744
      %v300 = vsel %vm298, %v293, 0
      %v302 = vsel %vm289, %v296, 0
      %v304 = vsel %vm289, %v297, 0
      %306 = vmatpush.msra.mxu0 0.0
      %307 = vmatpush.msra.mxu0 0.0
      %308 = vmatpush.msra.mxu0 0.0
      %309 = vmatpush.msra.mxu0 0.0
      %310 = vmatpush.msra.mxu0 0.0
      %311 = vmatpush.msra.mxu0 0.0
      %312 = vmatpush.msra.mxu0 0.0
      %313 = vmatpush.msra.mxu0 0.0
      %314 = vmatpush.msra.mxu0 0.0
      %315 = vmatpush.msra.mxu0 0.0
      %316 = vmatpush.msra.mxu0 0.0
      %317 = vmatpush.msra.mxu0 0.0
      %318 = vmatpush.msra.mxu0 0.0
      %319 = vmatpush.msra.mxu0 0.0
      %320 = vmatpush.msra.mxu0 0.0
      %321 = vmatpush.msra.mxu0 %v302
      %322 = vmatmul.f32.gmra.mxu0 %v300
      %v323 = vpop.f32.mrf.mxu0
      %v324 = vadd.f32 0.0, %v323
      %325 = vdwg.mxu0
      %326 = vmatpush.msra.mxu0 0.0
      %327 = vmatpush.msra.mxu0 0.0
      %328 = vmatpush.msra.mxu0 0.0
      %329 = vmatpush.msra.mxu0 0.0
      %330 = vmatpush.msra.mxu0 0.0
      %331 = vmatpush.msra.mxu0 0.0
      %332 = vmatpush.msra.mxu0 0.0
      %333 = vmatpush.msra.mxu0 0.0
      %334 = vmatpush.msra.mxu0 0.0
      %335 = vmatpush.msra.mxu0 0.0
      %336 = vmatpush.msra.mxu0 0.0
      %337 = vmatpush.msra.mxu0 0.0
      %338 = vmatpush.msra.mxu0 0.0
      %339 = vmatpush.msra.mxu0 0.0
      %340 = vmatpush.msra.mxu0 0.0
      %341 = vmatpush.msra.mxu0 %v304
      %342 = vmatmul.f32.gmra.mxu0 %v300
      %v343 = vpop.f32.mrf.mxu0
      %v344 = vadd.f32 0.0, %v343
      %345 = vdwg.mxu0
      %v346 = vadd.f32 %v283, %v324
      %v347 = vadd.f32 %v283, %v344
      %s348 = scalar_lea.vmem %s3, 4
      %v349 = vld [vmem:[%s348] sm:$0xf]
      %352 = vst [vmem:[#allocation1] ss:$2 sm:$0xff] %v273
      %s353 = scalar_lea.vmem [#allocation1], 16
      %354 = vst [vmem:[%s353] ss:$2 sm:$0xff] %v274
      %v355 = vld.sshfl [vmem:[#allocation1] sm:$0xff pattern:$0x75316420]
      %v356 = vld.sshfl [vmem:[#allocation1 + $0x8] sm:$0xff pattern:$0x75316420]
      %v357 = vld.sshfl [vmem:[#allocation1 + $0x10] sm:$0xff pattern:$0x75316420]
      %358 = vrot.lane.b32.xlu0 %v355, 127
      %v359 = vpop.permute.xlu0 %358
      %360 = vrot.lane.b32.xlu0 %v356, 127
      %v361 = vpop.permute.xlu0 %360
      %362 = vrot.lane.b32.xlu0 %v357, 127
      %v363 = vpop.permute.xlu0 %362
      %vm364 = vcmask 1039360
      %v365 = vsel %vm364, %v359, %v361
      %v366 = vsel %vm364, %v361, %v363
      %v368 = vsel %vm298, %v349, 0
      %v370 = vsel %vm289, %v365, 0
      %v372 = vsel %vm289, %v366, 0
      %374 = vmatpush.msra.mxu0 0.0
      %375 = vmatpush.msra.mxu0 0.0
      %376 = vmatpush.msra.mxu0 0.0
      %377 = vmatpush.msra.mxu0 0.0
      %378 = vmatpush.msra.mxu0 0.0
      %379 = vmatpush.msra.mxu0 0.0
      %380 = vmatpush.msra.mxu0 0.0
      %381 = vmatpush.msra.mxu0 0.0
      %382 = vmatpush.msra.mxu0 0.0
      %383 = vmatpush.msra.mxu0 0.0
      %384 = vmatpush.msra.mxu0 0.0
      %385 = vmatpush.msra.mxu0 0.0
      %386 = vmatpush.msra.mxu0 0.0
      %387 = vmatpush.msra.mxu0 0.0
      %388 = vmatpush.msra.mxu0 0.0
      %389 = vmatpush.msra.mxu0 %v370
      %390 = vmatmul.f32.gmra.mxu0 %v368
      %v391 = vpop.f32.mrf.mxu0
      %v392 = vadd.f32 0.0, %v391
      %393 = vdwg.mxu0
      %394 = vmatpush.msra.mxu0 0.0
      %395 = vmatpush.msra.mxu0 0.0
      %396 = vmatpush.msra.mxu0 0.0
      %397 = vmatpush.msra.mxu0 0.0
      %398 = vmatpush.msra.mxu0 0.0
      %399 = vmatpush.msra.mxu0 0.0
      %400 = vmatpush.msra.mxu0 0.0
      %401 = vmatpush.msra.mxu0 0.0
      %402 = vmatpush.msra.mxu0 0.0
      %403 = vmatpush.msra.mxu0 0.0
      %404 = vmatpush.msra.mxu0 0.0
      %405 = vmatpush.msra.mxu0 0.0
      %406 = vmatpush.msra.mxu0 0.0
      %407 = vmatpush.msra.mxu0 0.0
      %408 = vmatpush.msra.mxu0 0.0
      %409 = vmatpush.msra.mxu0 %v372
      %410 = vmatmul.f32.gmra.mxu0 %v368
      %v411 = vpop.f32.mrf.mxu0
      %v412 = vadd.f32 0.0, %v411
      %413 = vdwg.mxu0
      %v414 = vadd.f32 %v346, %v392
      %v415 = vadd.f32 %v347, %v412
      %s416 = scalar_lea.vmem %s3, 8
      %v417 = vld [vmem:[%s416] sm:$0xf]
      %420 = vst [vmem:[#allocation1] ss:$2 sm:$0xff] %v275
      %s421 = scalar_lea.vmem [#allocation1], 16
      %422 = vst [vmem:[%s421] ss:$2 sm:$0xff] %v276
      %v423 = vld.sshfl [vmem:[#allocation1] sm:$0xff pattern:$0x75316420]
      %v424 = vld.sshfl [vmem:[#allocation1 + $0x8] sm:$0xff pattern:$0x75316420]
      %v425 = vld.sshfl [vmem:[#allocation1 + $0x10] sm:$0xff pattern:$0x75316420]
      %426 = vrot.lane.b32.xlu0 %v423, 127
      %v427 = vpop.permute.xlu0 %426
      %428 = vrot.lane.b32.xlu0 %v424, 127
      %v429 = vpop.permute.xlu0 %428
      %430 = vrot.lane.b32.xlu0 %v425, 127
      %v431 = vpop.permute.xlu0 %430
      %v432 = vsel %vm364, %v427, %v429
      %v433 = vsel %vm364, %v429, %v431
      %v435 = vsel %vm298, %v417, 0
      %v437 = vsel %vm289, %v432, 0
      %v439 = vsel %vm289, %v433, 0
      %441 = vmatpush.msra.mxu0 0.0
      %442 = vmatpush.msra.mxu0 0.0
      %443 = vmatpush.msra.mxu0 0.0
      %444 = vmatpush.msra.mxu0 0.0
      %445 = vmatpush.msra.mxu0 0.0
      %446 = vmatpush.msra.mxu0 0.0
      %447 = vmatpush.msra.mxu0 0.0
      %448 = vmatpush.msra.mxu0 0.0
      %449 = vmatpush.msra.mxu0 0.0
      %450 = vmatpush.msra.mxu0 0.0
      %451 = vmatpush.msra.mxu0 0.0
      %452 = vmatpush.msra.mxu0 0.0
      %453 = vmatpush.msra.mxu0 0.0
      %454 = vmatpush.msra.mxu0 0.0
      %455 = vmatpush.msra.mxu0 0.0
      %456 = vmatpush.msra.mxu0 %v437
      %457 = vmatmul.f32.gmra.mxu0 %v435
      %v458 = vpop.f32.mrf.mxu0
      %v459 = vadd.f32 0.0, %v458
      %460 = vdwg.mxu0
      %461 = vmatpush.msra.mxu0 0.0
      %462 = vmatpush.msra.mxu0 0.0
      %463 = vmatpush.msra.mxu0 0.0
      %464 = vmatpush.msra.mxu0 0.0
      %465 = vmatpush.msra.mxu0 0.0
      %466 = vmatpush.msra.mxu0 0.0
      %467 = vmatpush.msra.mxu0 0.0
      %468 = vmatpush.msra.mxu0 0.0
      %469 = vmatpush.msra.mxu0 0.0
      %470 = vmatpush.msra.mxu0 0.0
      %471 = vmatpush.msra.mxu0 0.0
      %472 = vmatpush.msra.mxu0 0.0
      %473 = vmatpush.msra.mxu0 0.0
      %474 = vmatpush.msra.mxu0 0.0
      %475 = vmatpush.msra.mxu0 0.0
      %476 = vmatpush.msra.mxu0 %v439
      %477 = vmatmul.f32.gmra.mxu0 %v435
      %v478 = vpop.f32.mrf.mxu0
      %v479 = vadd.f32 0.0, %v478
      %480 = vdwg.mxu0
      %v481 = vadd.f32 %v414, %v459
      %v482 = vadd.f32 %v415, %v479
      %483 = vrot.lane.b32.xlu0 %v290, 16
      %v484 = vpop.permute.xlu0 %483
      %v485 = vrot.slane %v484, 4
      %vm486 = vcmask 130048
      %v487 = vsel %vm486, %v485, %v484
      %v490 = vmul.f32 %v271, %v487
      %v491 = vmul.f32 %v272, %v485
      %s492 = scalar_lea.vmem %s3, 12
      %v493 = vld [vmem:[%s492] sm:$0xf]
      %496 = vst [vmem:[#allocation1] ss:$2 sm:$0xff] %v490
      %s497 = scalar_lea.vmem [#allocation1], 16
      %498 = vst [vmem:[%s497] ss:$2 sm:$0xff] %v491
      %v499 = vld.sshfl [vmem:[#allocation1] sm:$0xff pattern:$0x75316420]
      %v500 = vld.sshfl [vmem:[#allocation1 + $0x8] sm:$0xff pattern:$0x75316420]
      %v501 = vld.sshfl [vmem:[#allocation1 + $0x10] sm:$0xff pattern:$0x75316420]
      %502 = vrot.lane.b32.xlu0 %v499, 112
      %v503 = vpop.permute.xlu0 %502
      %504 = vrot.lane.b32.xlu0 %v500, 112
      %v505 = vpop.permute.xlu0 %504
      %506 = vrot.lane.b32.xlu0 %v501, 112
      %v507 = vpop.permute.xlu0 %506
      %vm508 = vcmask 916480
      %v509 = vsel %vm508, %v503, %v505
      %v510 = vsel %vm508, %v505, %v507
      %v512 = vsel %vm298, %v493, 0
      %v514 = vsel %vm289, %v509, 0
      %v516 = vsel %vm289, %v510, 0
      %518 = vmatpush.msra.mxu0 0.0
      %519 = vmatpush.msra.mxu0 0.0
      %520 = vmatpush.msra.mxu0 0.0
      %521 = vmatpush.msra.mxu0 0.0
      %522 = vmatpush.msra.mxu0 0.0
      %523 = vmatpush.msra.mxu0 0.0
      %524 = vmatpush.msra.mxu0 0.0
      %525 = vmatpush.msra.mxu0 0.0
      %526 = vmatpush.msra.mxu0 0.0
      %527 = vmatpush.msra.mxu0 0.0
      %528 = vmatpush.msra.mxu0 0.0
      %529 = vmatpush.msra.mxu0 0.0
      %530 = vmatpush.msra.mxu0 0.0
      %531 = vmatpush.msra.mxu0 0.0
      %532 = vmatpush.msra.mxu0 0.0
      %533 = vmatpush.msra.mxu0 %v514
      %534 = vmatmul.f32.gmra.mxu0 %v512
      %v535 = vpop.f32.mrf.mxu0
      %v536 = vadd.f32 0.0, %v535
      %537 = vdwg.mxu0
      %538 = vmatpush.msra.mxu0 0.0
      %539 = vmatpush.msra.mxu0 0.0
      %540 = vmatpush.msra.mxu0 0.0
      %541 = vmatpush.msra.mxu0 0.0
      %542 = vmatpush.msra.mxu0 0.0
      %543 = vmatpush.msra.mxu0 0.0
      %544 = vmatpush.msra.mxu0 0.0
      %545 = vmatpush.msra.mxu0 0.0
      %546 = vmatpush.msra.mxu0 0.0
      %547 = vmatpush.msra.mxu0 0.0
      %548 = vmatpush.msra.mxu0 0.0
      %549 = vmatpush.msra.mxu0 0.0
      %550 = vmatpush.msra.mxu0 0.0
      %551 = vmatpush.msra.mxu0 0.0
      %552 = vmatpush.msra.mxu0 0.0
      %553 = vmatpush.msra.mxu0 %v516
      %554 = vmatmul.f32.gmra.mxu0 %v512
      %v555 = vpop.f32.mrf.mxu0
      %v556 = vadd.f32 0.0, %v555
      %557 = vdwg.mxu0
      %v558 = vadd.f32 %v481, %v536
      %v559 = vadd.f32 %v482, %v556
      %s560 = scalar_lea.vmem %s3, 16
      %v561 = vld [vmem:[%s560] sm:$0xf]
      %564 = vst [vmem:[#allocation1] ss:$2 sm:$0xff] %v269
      %s565 = scalar_lea.vmem [#allocation1], 16
      %566 = vst [vmem:[%s565] ss:$2 sm:$0xff] %v270
      %v567 = vld.sshfl [vmem:[#allocation1] sm:$0xff pattern:$0x75316420]
      %v568 = vld.sshfl [vmem:[#allocation1 + $0x8] sm:$0xff pattern:$0x75316420]
      %v569 = vld.sshfl [vmem:[#allocation1 + $0x10] sm:$0xff pattern:$0x75316420]
      %570 = vrot.lane.b32.xlu0 %v567, 111
      %v571 = vpop.permute.xlu0 %570
      %572 = vrot.lane.b32.xlu0 %v568, 111
      %v573 = vpop.permute.xlu0 %572
      %574 = vrot.lane.b32.xlu0 %v569, 111
      %v575 = vpop.permute.xlu0 %574
      %vm576 = vcmask 908288
      %v577 = vsel %vm576, %v571, %v573
      %v578 = vsel %vm576, %v573, %v575
      %v580 = vsel %vm298, %v561, 0
      %v582 = vsel %vm289, %v577, 0
      %v584 = vsel %vm289, %v578, 0
      %586 = vmatpush.msra.mxu0 0.0
      %587 = vmatpush.msra.mxu0 0.0
      %588 = vmatpush.msra.mxu0 0.0
      %589 = vmatpush.msra.mxu0 0.0
      %590 = vmatpush.msra.mxu0 0.0
      %591 = vmatpush.msra.mxu0 0.0
      %592 = vmatpush.msra.mxu0 0.0
      %593 = vmatpush.msra.mxu0 0.0
      %594 = vmatpush.msra.mxu0 0.0
      %595 = vmatpush.msra.mxu0 0.0
      %596 = vmatpush.msra.mxu0 0.0
      %597 = vmatpush.msra.mxu0 0.0
      %598 = vmatpush.msra.mxu0 0.0
      %599 = vmatpush.msra.mxu0 0.0
      %600 = vmatpush.msra.mxu0 0.0
      %601 = vmatpush.msra.mxu0 %v582
      %602 = vmatmul.f32.gmra.mxu0 %v580
      %v603 = vpop.f32.mrf.mxu0
      %v604 = vadd.f32 0.0, %v603
      %605 = vdwg.mxu0
      %606 = vmatpush.msra.mxu0 0.0
      %607 = vmatpush.msra.mxu0 0.0
      %608 = vmatpush.msra.mxu0 0.0
      %609 = vmatpush.msra.mxu0 0.0
      %610 = vmatpush.msra.mxu0 0.0
      %611 = vmatpush.msra.mxu0 0.0
      %612 = vmatpush.msra.mxu0 0.0
      %613 = vmatpush.msra.mxu0 0.0
      %614 = vmatpush.msra.mxu0 0.0
      %615 = vmatpush.msra.mxu0 0.0
      %616 = vmatpush.msra.mxu0 0.0
      %617 = vmatpush.msra.mxu0 0.0
      %618 = vmatpush.msra.mxu0 0.0
      %619 = vmatpush.msra.mxu0 0.0
      %620 = vmatpush.msra.mxu0 0.0
      %621 = vmatpush.msra.mxu0 %v584
      %622 = vmatmul.f32.gmra.mxu0 %v580
      %v623 = vpop.f32.mrf.mxu0
      %v624 = vadd.f32 0.0, %v623
      %625 = vdwg.mxu0
      %v626 = vadd.f32 %v558, %v604
      %v627 = vadd.f32 %v559, %v624
      %s628 = scalar_lea.vmem %s3, 20
      %v629 = vld [vmem:[%s628] sm:$0xf]
      %632 = vst [vmem:[#allocation1] ss:$2 sm:$0xff] %v271
      %s633 = scalar_lea.vmem [#allocation1], 16
      %634 = vst [vmem:[%s633] ss:$2 sm:$0xff] %v272
      %v635 = vld.sshfl [vmem:[#allocation1] sm:$0xff pattern:$0x75316420]
      %v636 = vld.sshfl [vmem:[#allocation1 + $0x8] sm:$0xff pattern:$0x75316420]
      %v637 = vld.sshfl [vmem:[#allocation1 + $0x10] sm:$0xff pattern:$0x75316420]
      %638 = vrot.lane.b32.xlu0 %v635, 111
      %v639 = vpop.permute.xlu0 %638
      %640 = vrot.lane.b32.xlu0 %v636, 111
      %v641 = vpop.permute.xlu0 %640
      %642 = vrot.lane.b32.xlu0 %v637, 111
      %v643 = vpop.permute.xlu0 %642
      %v644 = vsel %vm576, %v639, %v641
      %v645 = vsel %vm576, %v641, %v643
      %v647 = vsel %vm298, %v629, 0
      %v649 = vsel %vm289, %v644, 0
      %v651 = vsel %vm289, %v645, 0
      %653 = vmatpush.msra.mxu0 0.0
      %654 = vmatpush.msra.mxu0 0.0
      %655 = vmatpush.msra.mxu0 0.0
      %656 = vmatpush.msra.mxu0 0.0
      %657 = vmatpush.msra.mxu0 0.0
      %658 = vmatpush.msra.mxu0 0.0
      %659 = vmatpush.msra.mxu0 0.0
      %660 = vmatpush.msra.mxu0 0.0
      %661 = vmatpush.msra.mxu0 0.0
      %662 = vmatpush.msra.mxu0 0.0
      %663 = vmatpush.msra.mxu0 0.0
      %664 = vmatpush.msra.mxu0 0.0
      %665 = vmatpush.msra.mxu0 0.0
      %666 = vmatpush.msra.mxu0 0.0
      %667 = vmatpush.msra.mxu0 0.0
      %668 = vmatpush.msra.mxu0 %v649
      %669 = vmatmul.f32.gmra.mxu0 %v647
      %v670 = vpop.f32.mrf.mxu0
      %v671 = vadd.f32 0.0, %v670
      %672 = vdwg.mxu0
      %673 = vmatpush.msra.mxu0 0.0
      %674 = vmatpush.msra.mxu0 0.0
      %675 = vmatpush.msra.mxu0 0.0
      %676 = vmatpush.msra.mxu0 0.0
      %677 = vmatpush.msra.mxu0 0.0
      %678 = vmatpush.msra.mxu0 0.0
      %679 = vmatpush.msra.mxu0 0.0
      %680 = vmatpush.msra.mxu0 0.0
      %681 = vmatpush.msra.mxu0 0.0
      %682 = vmatpush.msra.mxu0 0.0
      %683 = vmatpush.msra.mxu0 0.0
      %684 = vmatpush.msra.mxu0 0.0
      %685 = vmatpush.msra.mxu0 0.0
      %686 = vmatpush.msra.mxu0 0.0
      %687 = vmatpush.msra.mxu0 0.0
      %688 = vmatpush.msra.mxu0 %v651
      %689 = vmatmul.f32.gmra.mxu0 %v647
      %v690 = vpop.f32.mrf.mxu0
      %v691 = vadd.f32 0.0, %v690
      %692 = vdwg.mxu0
      %v693 = vadd.f32 %v626, %v671
      %v694 = vadd.f32 %v627, %v691
      %v695 = vmul.f32 %v275, %v487
      %v696 = vmul.f32 %v276, %v485
      %s697 = scalar_lea.vmem %s3, 24
      %v698 = vld [vmem:[%s697] sm:$0xf]
      %701 = vst [vmem:[#allocation1] ss:$2 sm:$0xff] %v695
      %s702 = scalar_lea.vmem [#allocation1], 16
      %703 = vst [vmem:[%s702] ss:$2 sm:$0xff] %v696
      %v704 = vld.sshfl [vmem:[#allocation1] sm:$0xff pattern:$0x75316420]
      %v705 = vld.sshfl [vmem:[#allocation1 + $0x8] sm:$0xff pattern:$0x75316420]
      %v706 = vld.sshfl [vmem:[#allocation1 + $0x10] sm:$0xff pattern:$0x75316420]
      %707 = vrot.lane.b32.xlu0 %v704, 112
      %v708 = vpop.permute.xlu0 %707
      %709 = vrot.lane.b32.xlu0 %v705, 112
      %v710 = vpop.permute.xlu0 %709
      %711 = vrot.lane.b32.xlu0 %v706, 112
      %v712 = vpop.permute.xlu0 %711
      %v713 = vsel %vm508, %v708, %v710
      %v714 = vsel %vm508, %v710, %v712
      %v716 = vsel %vm298, %v698, 0
      %v718 = vsel %vm289, %v713, 0
      %v720 = vsel %vm289, %v714, 0
      %722 = vmatpush.msra.mxu0 0.0
      %723 = vmatpush.msra.mxu0 0.0
      %724 = vmatpush.msra.mxu0 0.0
      %725 = vmatpush.msra.mxu0 0.0
      %726 = vmatpush.msra.mxu0 0.0
      %727 = vmatpush.msra.mxu0 0.0
      %728 = vmatpush.msra.mxu0 0.0
      %729 = vmatpush.msra.mxu0 0.0
      %730 = vmatpush.msra.mxu0 0.0
      %731 = vmatpush.msra.mxu0 0.0
      %732 = vmatpush.msra.mxu0 0.0
      %733 = vmatpush.msra.mxu0 0.0
      %734 = vmatpush.msra.mxu0 0.0
      %735 = vmatpush.msra.mxu0 0.0
      %736 = vmatpush.msra.mxu0 0.0
      %737 = vmatpush.msra.mxu0 %v718
      %738 = vmatmul.f32.gmra.mxu0 %v716
      %v739 = vpop.f32.mrf.mxu0
      %v740 = vadd.f32 0.0, %v739
      %741 = vdwg.mxu0
      %742 = vmatpush.msra.mxu0 0.0
      %743 = vmatpush.msra.mxu0 0.0
      %744 = vmatpush.msra.mxu0 0.0
      %745 = vmatpush.msra.mxu0 0.0
      %746 = vmatpush.msra.mxu0 0.0
      %747 = vmatpush.msra.mxu0 0.0
      %748 = vmatpush.msra.mxu0 0.0
      %749 = vmatpush.msra.mxu0 0.0
      %750 = vmatpush.msra.mxu0 0.0
      %751 = vmatpush.msra.mxu0 0.0
      %752 = vmatpush.msra.mxu0 0.0
      %753 = vmatpush.msra.mxu0 0.0
      %754 = vmatpush.msra.mxu0 0.0
      %755 = vmatpush.msra.mxu0 0.0
      %756 = vmatpush.msra.mxu0 0.0
      %757 = vmatpush.msra.mxu0 %v720
      %758 = vmatmul.f32.gmra.mxu0 %v716
      %v759 = vpop.f32.mrf.mxu0
      %v760 = vadd.f32 0.0, %v759
      %761 = vdwg.mxu0
      %v762 = vadd.f32 %v693, %v740
      %v763 = vadd.f32 %v694, %v760
      %s764 = scalar_lea.vmem %s3, 28
      %v765 = vld [vmem:[%s764] sm:$0xf]
      %766 = vst [vmem:[#allocation1] ss:$2 sm:$0xff] %v273
      %s767 = scalar_lea.vmem [#allocation1], 16
      %768 = vst [vmem:[%s767] ss:$2 sm:$0xff] %v274
      %v769 = vld.sshfl [vmem:[#allocation1] sm:$0xff pattern:$0x75316420]
      %v770 = vld.sshfl [vmem:[#allocation1 + $0x8] sm:$0xff pattern:$0x75316420]
      %v771 = vld.sshfl [vmem:[#allocation1 + $0x10] sm:$0xff pattern:$0x75316420]
      %772 = vrot.lane.b32.xlu0 %v769, 111
      %v773 = vpop.permute.xlu0 %772
      %774 = vrot.lane.b32.xlu0 %v770, 111
      %v775 = vpop.permute.xlu0 %774
      %776 = vrot.lane.b32.xlu0 %v771, 111
      %v777 = vpop.permute.xlu0 %776
      %v778 = vsel %vm576, %v773, %v775
      %v779 = vsel %vm576, %v775, %v777
      %v781 = vsel %vm298, %v765, 0
      %v783 = vsel %vm289, %v778, 0
      %v785 = vsel %vm289, %v779, 0
      %787 = vmatpush.msra.mxu0 0.0
      %788 = vmatpush.msra.mxu0 0.0
      %789 = vmatpush.msra.mxu0 0.0
      %790 = vmatpush.msra.mxu0 0.0
      %791 = vmatpush.msra.mxu0 0.0
      %792 = vmatpush.msra.mxu0 0.0
      %793 = vmatpush.msra.mxu0 0.0
      %794 = vmatpush.msra.mxu0 0.0
      %795 = vmatpush.msra.mxu0 0.0
      %796 = vmatpush.msra.mxu0 0.0
      %797 = vmatpush.msra.mxu0 0.0
      %798 = vmatpush.msra.mxu0 0.0
      %799 = vmatpush.msra.mxu0 0.0
      %800 = vmatpush.msra.mxu0 0.0
      %801 = vmatpush.msra.mxu0 0.0
      %802 = vmatpush.msra.mxu0 %v783
      %803 = vmatmul.f32.gmra.mxu0 %v781
      %v804 = vpop.f32.mrf.mxu0
      %v805 = vadd.f32 0.0, %v804
      %806 = vdwg.mxu0
      %807 = vmatpush.msra.mxu0 0.0
      %808 = vmatpush.msra.mxu0 0.0
      %809 = vmatpush.msra.mxu0 0.0
      %810 = vmatpush.msra.mxu0 0.0
      %811 = vmatpush.msra.mxu0 0.0
      %812 = vmatpush.msra.mxu0 0.0
      %813 = vmatpush.msra.mxu0 0.0
      %814 = vmatpush.msra.mxu0 0.0
      %815 = vmatpush.msra.mxu0 0.0
      %816 = vmatpush.msra.mxu0 0.0
      %817 = vmatpush.msra.mxu0 0.0
      %818 = vmatpush.msra.mxu0 0.0
      %819 = vmatpush.msra.mxu0 0.0
      %820 = vmatpush.msra.mxu0 0.0
      %821 = vmatpush.msra.mxu0 0.0
      %822 = vmatpush.msra.mxu0 %v785
      %823 = vmatmul.f32.gmra.mxu0 %v781
      %v824 = vpop.f32.mrf.mxu0
      %v825 = vadd.f32 0.0, %v824
      %826 = vdwg.mxu0
      %v827 = vadd.f32 %v762, %v805
      %v828 = vadd.f32 %v763, %v825
      %s829 = scalar_lea.vmem %s3, 32
      %v830 = vld [vmem:[%s829] sm:$0xf]
      %831 = vst [vmem:[#allocation1] ss:$2 sm:$0xff] %v275
      %s832 = scalar_lea.vmem [#allocation1], 16
      %833 = vst [vmem:[%s832] ss:$2 sm:$0xff] %v276
      %v834 = vld.sshfl [vmem:[#allocation1] sm:$0xff pattern:$0x75316420]
      %v835 = vld.sshfl [vmem:[#allocation1 + $0x8] sm:$0xff pattern:$0x75316420]
      %v836 = vld.sshfl [vmem:[#allocation1 + $0x10] sm:$0xff pattern:$0x75316420]
      %837 = vrot.lane.b32.xlu0 %v834, 111
      %v838 = vpop.permute.xlu0 %837
      %839 = vrot.lane.b32.xlu0 %v835, 111
      %v840 = vpop.permute.xlu0 %839
      %841 = vrot.lane.b32.xlu0 %v836, 111
      %v842 = vpop.permute.xlu0 %841
      %v843 = vsel %vm576, %v838, %v840
      %v844 = vsel %vm576, %v840, %v842
      %v846 = vsel %vm298, %v830, 0
      %v848 = vsel %vm289, %v843, 0
      %v850 = vsel %vm289, %v844, 0
      %852 = vmatpush.msra.mxu0 0.0
      %853 = vmatpush.msra.mxu0 0.0
      %854 = vmatpush.msra.mxu0 0.0
      %855 = vmatpush.msra.mxu0 0.0
      %856 = vmatpush.msra.mxu0 0.0
      %857 = vmatpush.msra.mxu0 0.0
      %858 = vmatpush.msra.mxu0 0.0
      %859 = vmatpush.msra.mxu0 0.0
      %860 = vmatpush.msra.mxu0 0.0
      %861 = vmatpush.msra.mxu0 0.0
      %862 = vmatpush.msra.mxu0 0.0
      %863 = vmatpush.msra.mxu0 0.0
      %864 = vmatpush.msra.mxu0 0.0
      %865 = vmatpush.msra.mxu0 0.0
      %866 = vmatpush.msra.mxu0 0.0
      %867 = vmatpush.msra.mxu0 %v848
      %868 = vmatmul.f32.gmra.mxu0 %v846
      %v869 = vpop.f32.mrf.mxu0
      %v870 = vadd.f32 0.0, %v869
      %871 = vdwg.mxu0
      %872 = vmatpush.msra.mxu0 0.0
      %873 = vmatpush.msra.mxu0 0.0
      %874 = vmatpush.msra.mxu0 0.0
      %875 = vmatpush.msra.mxu0 0.0
      %876 = vmatpush.msra.mxu0 0.0
      %877 = vmatpush.msra.mxu0 0.0
      %878 = vmatpush.msra.mxu0 0.0
      %879 = vmatpush.msra.mxu0 0.0
      %880 = vmatpush.msra.mxu0 0.0
      %881 = vmatpush.msra.mxu0 0.0
      %882 = vmatpush.msra.mxu0 0.0
      %883 = vmatpush.msra.mxu0 0.0
      %884 = vmatpush.msra.mxu0 0.0
      %885 = vmatpush.msra.mxu0 0.0
      %886 = vmatpush.msra.mxu0 0.0
      %887 = vmatpush.msra.mxu0 %v850
      %888 = vmatmul.f32.gmra.mxu0 %v846
      %v889 = vpop.f32.mrf.mxu0
      %v890 = vadd.f32 0.0, %v889
      %891 = vdwg.mxu0
      %v892 = vadd.f32 %v827, %v870
      %v893 = vadd.f32 %v828, %v890
      %v894 = vmax.f32 %v892, 0.0
      %v895 = vmax.f32 %v893, 0.0
      %v896 = vld [vmem:[%s254] sm:$0xff]
      %898 = vst [vmem:[#allocation1] ss:$2 sm:$0xff] %v896
      %v899 = vld.sshfl [vmem:[#allocation1] sm:$0xff pattern:$0x75316420]
      %v900 = vld.sshfl [vmem:[#allocation1 + $0x8] sm:$0xff pattern:$0x75316420]
      %v903 = vadd.f32 %v894, %v899
      %v904 = vadd.f32 %v895, %v900
      %v905 = vld [vmem:[%s259] sm:$0xf]
      %v906 = vunpack.c.l.bf16 %v905
      %908 = vst [vmem:[#allocation1] ss:$2 sm:$0xff] %v906
      %v909 = vld.sshfl [vmem:[#allocation1] sm:$0xff pattern:$0x75316420]
      %v910 = vld.sshfl [vmem:[#allocation1 + $0x8] sm:$0xff pattern:$0x75316420]
      %v913 = vadd.f32 %v903, %v909
      %v914 = vadd.f32 %v904, %v910
      %v917 = vrot.slane %v914, 4
      %v918 = vsel %vm289, %v913, %v917
      %920 = vst [vmem:[%s264] sm:$0xff] %v918
      %p921 = scmp.lt.s32.totalorder %s16, 1
      %s922 = scalar_select %p921, %s16, 1
      %s923 = smul.addr %s922, 2
      %s924 = smul.addr %s923, 4
      %s925 = scalar_lea.vmem %s5, %s924
      // Predicated region
      $region41: #{densfuse.1} parent=39 // pred_check
        %p926 = pneg %p154
      $region42: #{densfuse.1} parent=39 // pred_check_branch
        %928 = sbr.rel (%p926) target = $region44
      $region43: #{densfuse.1} parent=39 // pred_region
        _
      $region44: #{densfuse.1} parent=39 // pred_fallthru
        _
    $region40: #{densfuse.1} parent=5 // pred_fallthru
      _
    %p929 = scmp.le.s32.totalorder 2, %s11
    // Predicated region
    $region45: #{densfuse.1} parent=5 // pred_check
      %p930 = pneg %p929
    $region46: #{densfuse.1} parent=5 // pred_check_branch
      %932 = sbr.rel (%p930) target = $region48
    $region47: #{densfuse.1} parent=5 // pred_region
      %s933 = ssub.s32 %s11, 2
      // Predicated region
      $region49: #{densfuse.1} parent=47 // pred_check
        %p934 = pneg %p160
      $region50: #{densfuse.1} parent=47 // pred_check_branch
        %936 = sbr.rel (%p934) target = $region52
      $region51: #{densfuse.1} parent=47 // pred_region
        %p937 = scmp.lt.s32.totalorder %s17, 1
        %s938 = scalar_select %p937, %s17, 1
        %s939 = smul.addr %s938, 2
        %s940 = smul.addr %s939, 4
        %s941 = scalar_lea.vmem %s5, %s940
      $region52: #{densfuse.1} parent=47 // pred_fallthru
        _
    $region48: #{densfuse.1} parent=5 // pred_fallthru
      _
  $region6: #{densfuse.1} parent=0 // loop_footer
    %s15 = sadd.s32 1, %s11
  $region7: #{densfuse.1} parent=0 // loop_footer_branch
    %10 = sbr.rel target = $region3
  $region8: #{densfuse.1} parent=0 // loop_exit
    _

</llo_original>
